<compile_context>
chip_gen: v7x
topology: tpu7x:2x2x1
jax: 0.10.0
libtpu: 0.0.40
codegen_flags: <defaults>
</compile_context>

<pallas_src>
import jax
import jax.numpy as jnp
from jax.experimental import pallas as pl
from jax.experimental.pallas import tpu as pltpu

BN_EPS = 1e-5


def _gmf_kernel(ids_ref, tab_ref, scale_ref, shift_ref, out_ref):
    """One batch tile of the GMF forward.

    ids_ref   : (L, TB)  int32  user ids rows [:Lu], genre ids rows [Lu:]
                                (genre ids pre-offset by the user vocab size),
                                batch on the lane axis.
    tab_ref   : (2E, V)  f32    transposed block-diagonal embedding table.
    scale_ref : (2E, 1)  f32    fused (BatchNorm o mean-pool) scale.
    shift_ref : (2E, 1)  f32    fused BatchNorm shift.
    out_ref   : (1, TB)  f32    sigmoid scores, lane-dense.
    """
    ids = ids_ref[...]
    tab = tab_ref[...]
    scale = scale_ref[...]
    shift = shift_ref[...]

    seq_len, tile_b = ids.shape
    e2, vocab = tab.shape
    e = e2 // 2

    # One-hot counts over the fused (user+genre) vocab: counts[v, b] = number of
    # occurrences of id v in batch column b.  seq_len is small & static ->
    # unrolled; compares accumulate in int32 and are cast to f32 once.
    iota_v = jax.lax.broadcasted_iota(jnp.int32, (vocab, tile_b), 0)
    counts = jnp.zeros((vocab, tile_b), jnp.int32)
    for l in range(seq_len):
        counts = counts + (ids[l:l + 1, :] == iota_v).astype(jnp.int32)
    counts = counts.astype(jnp.float32)

    # Single fused MXU pass: (2E, V) @ (V, TB) -> (2E, TB).
    # Rows [:E] hold the summed user embeddings, rows [E:] the genre ones.
    pool = jnp.dot(tab, counts, preferred_element_type=jnp.float32)

    # Mean-pool (1/L) and inference BatchNorm folded into one scale + shift.
    # TODO(synk): dropout is identity and BN uses running statistics (eval
    # mode); training-mode dropout / batch-statistics BN are not implemented.
    bn = pool * scale + shift                                   # (2E, TB)

    # GMF head: elementwise product + reduction over the embedding dim.  The
    # sublane reduce lands the result directly in a lane-dense (1, TB) row.
    score = jnp.sum(bn[:e, :] * bn[e:, :], axis=0, keepdims=True)

    # sigmoid: exp on the EUP, exact reciprocal (approx=True would push the
    # divide to the EUP as well at ~1e-4 relative error).
    out_ref[...] = pl.reciprocal(1.0 + jnp.exp(-score))


def gmf_forward(user_ids, genre_ids, user_table, genre_table,
                gamma, beta, run_mean, run_var, *, block_b=128):
    b, lu = user_ids.shape
    _, lg = genre_ids.shape
    vu, e = user_table.shape
    vg, _ = genre_table.shape
    vocab = vu + vg
    l_total = lu + lg

    # Clamp ids so out-of-range behaves like jnp.take (the reference path).
    uid = jnp.clip(user_ids.astype(jnp.int32), 0, vu - 1)
    gid = jnp.clip(genre_ids.astype(jnp.int32), 0, vg - 1)

    # Fused id tensor: genre ids offset into the second half of the fused
    # vocab; batch moved to the lane (last) axis and padded to the tile size.
    ids = jnp.concatenate([uid, gid + vu], axis=1).T            # (L, B)
    n_tiles = pl.cdiv(b, block_b)
    b_pad = n_tiles * block_b
    ids = jnp.pad(ids, ((0, 0), (0, b_pad - b)))                # pad with id 0

    # Transposed block-diagonal table: one MXU matmul serves both lookups.
    tab = jnp.zeros((2 * e, vocab), jnp.float32)
    tab = tab.at[:e, :vu].set(user_table.T)
    tab = tab.at[e:, vu:].set(genre_table.T)

    # Fold inference BatchNorm and the 1/L pooling scale into per-channel
    # constants (one shared BN applied to both branches, as in the module).
    inv_std = jax.lax.rsqrt(run_var + BN_EPS)
    bn_scale = gamma * inv_std                                  # (E,)
    bn_shift = beta - run_mean * bn_scale                       # (E,)
    scale = jnp.concatenate([bn_scale / lu, bn_scale / lg]).reshape(2 * e, 1)
    shift = jnp.concatenate([bn_shift, bn_shift]).reshape(2 * e, 1)

    out = pl.pallas_call(
        _gmf_kernel,
        out_shape=jax.ShapeDtypeStruct((1, b_pad), jnp.float32),
        grid=(n_tiles,),
        in_specs=[
            pl.BlockSpec((l_total, block_b), lambda i: (0, i)),   # ids tile
            pl.BlockSpec((2 * e, vocab), lambda i: (0, 0)),       # table (resident)
            pl.BlockSpec((2 * e, 1), lambda i: (0, 0)),           # fused scale
            pl.BlockSpec((2 * e, 1), lambda i: (0, 0)),           # fused shift
        ],
        out_specs=pl.BlockSpec((1, block_b), lambda i: (0, i)),   # lane-dense out
        compiler_params=pltpu.CompilerParams(
            dimension_semantics=("parallel",)),
    )(ids, tab, scale, shift)
    return out[0, :b]


def gmf_reference(user_ids, genre_ids, user_table, genre_table,
                  gamma, beta, run_mean, run_var):
    def bn(x):
        return (x - run_mean) / jnp.sqrt(run_var + BN_EPS) * gamma + beta
    u = bn(jnp.take(user_table, user_ids, axis=0).mean(axis=1))
    g = bn(jnp.take(genre_table, genre_ids, axis=0).mean(axis=1))
    return jax.nn.sigmoid(jnp.sum(u * g, axis=1))


if __name__ == "__main__":
    # Small shapes consistent with the module: emb_dim=32, vocab sizes 32/16,
    # batch=8, user-sequence=6, genre-sequence=4.
    USER_VOCAB, GENRE_VOCAB, EMB_DIM = 32, 16, 32
    B, LU, LG = 8, 6, 4

    key = jax.random.PRNGKey(0)
    k = jax.random.split(key, 8)
    user_table = jax.random.normal(k[0], (USER_VOCAB, EMB_DIM), jnp.float32)
    genre_table = jax.random.normal(k[1], (GENRE_VOCAB, EMB_DIM), jnp.float32)
    gamma = 1.0 + 0.1 * jax.random.normal(k[2], (EMB_DIM,), jnp.float32)
    beta = 0.1 * jax.random.normal(k[3], (EMB_DIM,), jnp.float32)
    run_mean = 0.1 * jax.random.normal(k[4], (EMB_DIM,), jnp.float32)
    run_var = jax.random.uniform(k[5], (EMB_DIM,), jnp.float32, 0.5, 1.5)

    user_ids = jax.random.randint(k[6], (B, LU), 0, USER_VOCAB, jnp.int32)
    genre_ids = jax.random.randint(k[7], (B, LG), 0, GENRE_VOCAB, jnp.int32)

    out = gmf_forward(user_ids, genre_ids, user_table, genre_table,
                      gamma, beta, run_mean, run_var)
    out = jax.block_until_ready(out)

    ref = gmf_reference(user_ids, genre_ids, user_table, genre_table,
                        gamma, beta, run_mean, run_var)
    assert out.shape == (B,)
    assert jnp.allclose(out, ref, atol=1e-5, rtol=1e-5), (out, ref)
    print("KERNEL_OK")
</pallas_src>

<mosaic_0001>
module attributes {stable_mosaic.version = 11 : i64} {
  func.func @_gmf_kernel(%arg0: i32, %arg1: memref<10x128xi32, #tpu.memory_space<vmem>>, %arg2: memref<64x48xf32, #tpu.memory_space<vmem>>, %arg3: memref<64x1xf32, #tpu.memory_space<vmem>>, %arg4: memref<64x1xf32, #tpu.memory_space<vmem>>, %arg5: memref<1x128xf32, #tpu.memory_space<vmem>>) attributes {dimension_semantics = [#tpu.dimension_semantics<parallel>], iteration_bounds = array<i64: 1>, scalar_prefetch = 0 : i64, scratch_operands = 0 : i64, tpu.core_type = #tpu.core_type<tc>, window_params = [{transform_indices = @transform_0, window_bounds = array<i64: 10, 128>}, {pipeline_mode = #tpu.pipeline_mode<synchronous>, transform_indices = @transform_1, window_bounds = array<i64: 64, 48>}, {pipeline_mode = #tpu.pipeline_mode<synchronous>, transform_indices = @transform_2, window_bounds = array<i64: 64, 1>}, {pipeline_mode = #tpu.pipeline_mode<synchronous>, transform_indices = @transform_3, window_bounds = array<i64: 64, 1>}, {transform_indices = @transform_4, window_bounds = array<i64: 1, 128>}]} {
    %c0 = arith.constant 0 : index
    %c0_0 = arith.constant 0 : index
    %0 = vector.load %arg1[%c0, %c0_0] : memref<10x128xi32, #tpu.memory_space<vmem>>, vector<10x128xi32>
    %c0_1 = arith.constant 0 : index
    %c0_2 = arith.constant 0 : index
    %1 = vector.load %arg2[%c0_1, %c0_2] : memref<64x48xf32, #tpu.memory_space<vmem>>, vector<64x48xf32>
    %c0_3 = arith.constant 0 : index
    %c0_4 = arith.constant 0 : index
    %2 = vector.load %arg3[%c0_3, %c0_4] : memref<64x1xf32, #tpu.memory_space<vmem>>, vector<64x1xf32>
    %c0_5 = arith.constant 0 : index
    %c0_6 = arith.constant 0 : index
    %3 = vector.load %arg4[%c0_5, %c0_6] : memref<64x1xf32, #tpu.memory_space<vmem>>, vector<64x1xf32>
    %4 = tpu.iota {dimensions = array<i32: 0>} : vector<48x128xi32>
    %c0_i32 = arith.constant 0 : i32
    %5 = vector.broadcast %c0_i32 : i32 to vector<48x128xi32>
    %6 = vector.extract_strided_slice %0 {offsets = [0, 0], sizes = [1, 128], strides = [1, 1]} : vector<10x128xi32> to vector<1x128xi32>
    %7 = vector.broadcast %6 : vector<1x128xi32> to vector<48x128xi32>
    %8 = arith.cmpi eq, %7, %4 : vector<48x128xi32>
    %9 = arith.extui %8 : vector<48x128xi1> to vector<48x128xi32>
    %10 = arith.addi %5, %9 : vector<48x128xi32>
    %11 = vector.extract_strided_slice %0 {offsets = [1, 0], sizes = [1, 128], strides = [1, 1]} : vector<10x128xi32> to vector<1x128xi32>
    %12 = vector.broadcast %11 : vector<1x128xi32> to vector<48x128xi32>
    %13 = arith.cmpi eq, %12, %4 : vector<48x128xi32>
    %14 = arith.extui %13 : vector<48x128xi1> to vector<48x128xi32>
    %15 = arith.addi %10, %14 : vector<48x128xi32>
    %16 = vector.extract_strided_slice %0 {offsets = [2, 0], sizes = [1, 128], strides = [1, 1]} : vector<10x128xi32> to vector<1x128xi32>
    %17 = vector.broadcast %16 : vector<1x128xi32> to vector<48x128xi32>
    %18 = arith.cmpi eq, %17, %4 : vector<48x128xi32>
    %19 = arith.extui %18 : vector<48x128xi1> to vector<48x128xi32>
    %20 = arith.addi %15, %19 : vector<48x128xi32>
    %21 = vector.extract_strided_slice %0 {offsets = [3, 0], sizes = [1, 128], strides = [1, 1]} : vector<10x128xi32> to vector<1x128xi32>
    %22 = vector.broadcast %21 : vector<1x128xi32> to vector<48x128xi32>
    %23 = arith.cmpi eq, %22, %4 : vector<48x128xi32>
    %24 = arith.extui %23 : vector<48x128xi1> to vector<48x128xi32>
    %25 = arith.addi %20, %24 : vector<48x128xi32>
    %26 = vector.extract_strided_slice %0 {offsets = [4, 0], sizes = [1, 128], strides = [1, 1]} : vector<10x128xi32> to vector<1x128xi32>
    %27 = vector.broadcast %26 : vector<1x128xi32> to vector<48x128xi32>
    %28 = arith.cmpi eq, %27, %4 : vector<48x128xi32>
    %29 = arith.extui %28 : vector<48x128xi1> to vector<48x128xi32>
    %30 = arith.addi %25, %29 : vector<48x128xi32>
    %31 = vector.extract_strided_slice %0 {offsets = [5, 0], sizes = [1, 128], strides = [1, 1]} : vector<10x128xi32> to vector<1x128xi32>
    %32 = vector.broadcast %31 : vector<1x128xi32> to vector<48x128xi32>
    %33 = arith.cmpi eq, %32, %4 : vector<48x128xi32>
    %34 = arith.extui %33 : vector<48x128xi1> to vector<48x128xi32>
    %35 = arith.addi %30, %34 : vector<48x128xi32>
    %36 = vector.extract_strided_slice %0 {offsets = [6, 0], sizes = [1, 128], strides = [1, 1]} : vector<10x128xi32> to vector<1x128xi32>
    %37 = vector.broadcast %36 : vector<1x128xi32> to vector<48x128xi32>
    %38 = arith.cmpi eq, %37, %4 : vector<48x128xi32>
    %39 = arith.extui %38 : vector<48x128xi1> to vector<48x128xi32>
    %40 = arith.addi %35, %39 : vector<48x128xi32>
    %41 = vector.extract_strided_slice %0 {offsets = [7, 0], sizes = [1, 128], strides = [1, 1]} : vector<10x128xi32> to vector<1x128xi32>
    %42 = vector.broadcast %41 : vector<1x128xi32> to vector<48x128xi32>
    %43 = arith.cmpi eq, %42, %4 : vector<48x128xi32>
    %44 = arith.extui %43 : vector<48x128xi1> to vector<48x128xi32>
    %45 = arith.addi %40, %44 : vector<48x128xi32>
    %46 = vector.extract_strided_slice %0 {offsets = [8, 0], sizes = [1, 128], strides = [1, 1]} : vector<10x128xi32> to vector<1x128xi32>
    %47 = vector.broadcast %46 : vector<1x128xi32> to vector<48x128xi32>
    %48 = arith.cmpi eq, %47, %4 : vector<48x128xi32>
    %49 = arith.extui %48 : vector<48x128xi1> to vector<48x128xi32>
    %50 = arith.addi %45, %49 : vector<48x128xi32>
    %51 = vector.extract_strided_slice %0 {offsets = [9, 0], sizes = [1, 128], strides = [1, 1]} : vector<10x128xi32> to vector<1x128xi32>
    %52 = vector.broadcast %51 : vector<1x128xi32> to vector<48x128xi32>
    %53 = arith.cmpi eq, %52, %4 : vector<48x128xi32>
    %54 = arith.extui %53 : vector<48x128xi1> to vector<48x128xi32>
    %55 = arith.addi %50, %54 : vector<48x128xi32>
    %56 = arith.sitofp %55 : vector<48x128xi32> to vector<48x128xf32>
    %cst = arith.constant dense<0.000000e+00> : vector<64x128xf32>
    %57 = tpu.matmul %1, %56, %cst {dimension_numbers = #tpu.dot_dimension_numbers<[1], [0], [0], [1], [0, 0, 1, 1], [], []>} : vector<64x48xf32>, vector<48x128xf32>, vector<64x128xf32> -> vector<64x128xf32>
    %58 = vector.broadcast %2 : vector<64x1xf32> to vector<64x128xf32>
    %59 = arith.mulf %57, %58 : vector<64x128xf32>
    %60 = vector.broadcast %3 : vector<64x1xf32> to vector<64x128xf32>
    %61 = arith.addf %59, %60 : vector<64x128xf32>
    %62 = vector.extract_strided_slice %61 {offsets = [0, 0], sizes = [32, 128], strides = [1, 1]} : vector<64x128xf32> to vector<32x128xf32>
    %63 = vector.extract_strided_slice %61 {offsets = [32, 0], sizes = [32, 128], strides = [1, 1]} : vector<64x128xf32> to vector<32x128xf32>
    %64 = arith.mulf %62, %63 : vector<32x128xf32>
    %cst_7 = arith.constant dense<0.000000e+00> : vector<128xf32>
    %65 = vector.multi_reduction <add>, %64, %cst_7 [0] : vector<32x128xf32> to vector<128xf32>
    %66 = vector.shape_cast %65 : vector<128xf32> to vector<1x128xf32>
    %cst_8 = arith.constant 0.000000e+00 : f32
    %67 = vector.broadcast %cst_8 : f32 to vector<1x128xf32>
    %68 = arith.subf %67, %66 : vector<1x128xf32>
    %69 = math.exp %68 : vector<1x128xf32>
    %cst_9 = arith.constant 1.000000e+00 : f32
    %70 = vector.broadcast %cst_9 : f32 to vector<1x128xf32>
    %71 = arith.addf %70, %69 : vector<1x128xf32>
    %72 = tpu.reciprocal %71 : vector<1x128xf32> -> vector<1x128xf32>
    %c0_10 = arith.constant 0 : index
    %c0_11 = arith.constant 0 : index
    %73 = vector.load %arg5[%c0_10, %c0_11] : memref<1x128xf32, #tpu.memory_space<vmem>>, vector<1x128xf32>
    tpu.vector_store %arg5[%c0_10, %c0_11], %72 {strides = array<i32>} : memref<1x128xf32, #tpu.memory_space<vmem>>, vector<1x128xf32>,
    return
  }
  func.func @transform_0(%arg0: i32) -> (i32, i32) {
    %c0_i32 = arith.constant 0 : i32
    %c0_i32_0 = arith.constant 0 : i32
    return %c0_i32, %arg0 : i32, i32
  }
  func.func @transform_1(%arg0: i32) -> (i32, i32) {
    %c0_i32 = arith.constant 0 : i32
    %c0_i32_0 = arith.constant 0 : i32
    %c0_i32_1 = arith.constant 0 : i32
    return %c0_i32, %c0_i32_0 : i32, i32
  }
  func.func @transform_2(%arg0: i32) -> (i32, i32) {
    %c0_i32 = arith.constant 0 : i32
    %c0_i32_0 = arith.constant 0 : i32
    %c0_i32_1 = arith.constant 0 : i32
    return %c0_i32, %c0_i32_0 : i32, i32
  }
  func.func @transform_3(%arg0: i32) -> (i32, i32) {
    %c0_i32 = arith.constant 0 : i32
    %c0_i32_0 = arith.constant 0 : i32
    %c0_i32_1 = arith.constant 0 : i32
    return %c0_i32, %c0_i32_0 : i32, i32
  }
  func.func @transform_4(%arg0: i32) -> (i32, i32) {
    %c0_i32 = arith.constant 0 : i32
    %c0_i32_0 = arith.constant 0 : i32
    return %c0_i32, %arg0 : i32, i32
  }
}

</mosaic_0001>

<llo_original>
// kernel: tpu_custom_call.1
$region0: #{tpu_custom_call.1}
  #allocation0 [shape = 'u32[]', space=smem, size = 0x4, offset = 0x4, fixed_abs, tag = 'smem constant byte address 0x4 - core index']
  #allocation1 [shape = 'u32[144,128]{1,0:T(1,128)}', space=vmem, size = 0x12000, scoped, tag = 'internal scratch']
  %s0 = inlined_call_operand.vmem [shape: s32[10,128], index: 0, kind: input, shape index: {}]
  %s1 = inlined_call_operand.vmem [shape: f32[64,48], index: 1, kind: input, shape index: {}]
  %s2 = inlined_call_operand.vmem [shape: f32[64,1], index: 2, kind: input, shape index: {}]
  %s3 = inlined_call_operand.vmem [shape: f32[64,1], index: 3, kind: input, shape index: {}]
  %s4 = inlined_call_operand.hbm [shape: f32[1,128], index: 4, kind: output, shape index: {}]
  %s5 = sld [smem:[#allocation0]]
  $region26: #{tpu_custom_call.1} parent=0
    _
  %s7 = ssub.s32 1, %s5
  %s8 = scalar_select 0, %s7, %s5
  $region1: #{tpu_custom_call.1} parent=0
    #allocation2 [shape = 'u8[512]{0}', space=vmem, size = 0x400, scoped, tag = 'output window, operand 0, single buffered']
    #allocation3 [shape = 's32[1]{0}', space=sflag, size = 0x4, scoped, tag = 'scoped memory for tpu_custom_call.1']
    %9 = vsyncpa [#allocation3], 0
    // Predicated region
    $region2: #{tpu_custom_call.1} parent=1 // pred_check
      _
    $region3: #{tpu_custom_call.1} parent=1 // pred_check_branch
      %11 = sbr.rel (0) target = $region5
    $region4: #{tpu_custom_call.1} parent=1 // pred_region
      _
    $region5: #{tpu_custom_call.1} parent=1 // pred_fallthru
      _
    // Predicated region
    $region6: #{tpu_custom_call.1} parent=1 // pred_check
      _
    $region7: #{tpu_custom_call.1} parent=1 // pred_check_branch
      %13 = sbr.rel (0) target = $region9
    $region8: #{tpu_custom_call.1} parent=1 // pred_region
      _
    $region9: #{tpu_custom_call.1} parent=1 // pred_fallthru
      _
    // Predicated region
    $region10: #{tpu_custom_call.1} parent=1 // pred_check
      _
    $region11: #{tpu_custom_call.1} parent=1 // pred_check_branch
      %15 = sbr.rel (0) target = $region13
    $region12: #{tpu_custom_call.1} parent=1 // pred_region
      _
    $region13: #{tpu_custom_call.1} parent=1 // pred_fallthru
      _
    // Predicated region
    $region14: #{tpu_custom_call.1} parent=1 // pred_check
      _
    $region15: #{tpu_custom_call.1} parent=1 // pred_check_branch
      %17 = sbr.rel (0) target = $region17
    $region16: #{tpu_custom_call.1} parent=1 // pred_region
      _
    $region17: #{tpu_custom_call.1} parent=1 // pred_fallthru
      _
    %v18 = vld [vmem:[%s0] sm:$0xff]
    %v19 = vld [vmem:[%s0 + $0x8] sm:$0x3]
    %v20 = vld [vmem:[%s1] sm:$0xff]
    %v21 = vld [vmem:[%s1 + $0x8] sm:$0xff]
    %v22 = vld [vmem:[%s1 + $0x10] sm:$0xff]
    %v23 = vld [vmem:[%s1 + $0x18] sm:$0xff]
    %v24 = vld [vmem:[%s1 + $0x20] sm:$0xff]
    %v25 = vld [vmem:[%s1 + $0x28] sm:$0xff]
    %v26 = vld [vmem:[%s1 + $0x30] sm:$0xff]
    %v27 = vld [vmem:[%s1 + $0x38] sm:$0xff]
    %v28 = vld [vmem:[%s2] sm:$0xff]
    %v29 = vld [vmem:[%s2 + $0x8] sm:$0xff]
    %v30 = vld [vmem:[%s2 + $0x10] sm:$0xff]
    %v31 = vld [vmem:[%s2 + $0x18] sm:$0xff]
    %v32 = vld [vmem:[%s2 + $0x20] sm:$0xff]
    %v33 = vld [vmem:[%s2 + $0x28] sm:$0xff]
    %v34 = vld [vmem:[%s2 + $0x30] sm:$0xff]
    %v35 = vld [vmem:[%s2 + $0x38] sm:$0xff]
    %v36 = vld [vmem:[%s3] sm:$0xff]
    %v37 = vld [vmem:[%s3 + $0x8] sm:$0xff]
    %v38 = vld [vmem:[%s3 + $0x10] sm:$0xff]
    %v39 = vld [vmem:[%s3 + $0x18] sm:$0xff]
    %v40 = vld [vmem:[%s3 + $0x20] sm:$0xff]
    %v41 = vld [vmem:[%s3 + $0x28] sm:$0xff]
    %v42 = vld [vmem:[%s3 + $0x30] sm:$0xff]
    %v43 = vld [vmem:[%s3 + $0x38] sm:$0xff]
    %v44 = vlaneseq
    %v45 = vshrl.u32 %v44, 7
    %v46 = vadd.s32 %v45, 8
    %v47 = vadd.s32 %v45, 16
    %v48 = vadd.s32 %v45, 24
    %v49 = vadd.s32 %v45, 32
    %v50 = vadd.s32 %v45, 40
    %v51 = vlaneseq
    %v52 = vshrl.u32 %v51, 7
    %v53 = vsub.s32 0, %v52
    %v54 = vrot.slane %v18, %v53
    %vm55 = vcmp.eq.s32.totalorder %v54, %v45
    %vm56 = vcmp.eq.s32.totalorder %v54, %v46
    %vm57 = vcmp.eq.s32.totalorder %v54, %v47
    %vm58 = vcmp.eq.s32.totalorder %v54, %v48
    %vm59 = vcmp.eq.s32.totalorder %v54, %v49
    %vm60 = vcmp.eq.s32.totalorder %v54, %v50
    %v61 = vsel %vm55, 1, 0
    %v62 = vsel %vm56, 1, 0
    %v63 = vsel %vm57, 1, 0
    %v64 = vsel %vm58, 1, 0
    %v65 = vsel %vm59, 1, 0
    %v66 = vsel %vm60, 1, 0
    %v67 = vlaneseq
    %v68 = vshrl.u32 %v67, 7
    %v69 = vsub.s32 1, %v68
    %v70 = vrot.slane %v18, %v69
    %vm71 = vcmp.eq.s32.totalorder %v70, %v45
    %vm72 = vcmp.eq.s32.totalorder %v70, %v46
    %vm73 = vcmp.eq.s32.totalorder %v70, %v47
    %vm74 = vcmp.eq.s32.totalorder %v70, %v48
    %vm75 = vcmp.eq.s32.totalorder %v70, %v49
    %vm76 = vcmp.eq.s32.totalorder %v70, %v50
    %v77 = vsel %vm71, 1, 0
    %v78 = vsel %vm72, 1, 0
    %v79 = vsel %vm73, 1, 0
    %v80 = vsel %vm74, 1, 0
    %v81 = vsel %vm75, 1, 0
    %v82 = vsel %vm76, 1, 0
    %v83 = vadd.s32 %v61, %v77
    %v84 = vadd.s32 %v62, %v78
    %v85 = vadd.s32 %v63, %v79
    %v86 = vadd.s32 %v64, %v80
    %v87 = vadd.s32 %v65, %v81
    %v88 = vadd.s32 %v66, %v82
    %v89 = vlaneseq
    %v90 = vshrl.u32 %v89, 7
    %v91 = vsub.s32 2, %v90
    %v92 = vrot.slane %v18, %v91
    %vm93 = vcmp.eq.s32.totalorder %v92, %v45
    %vm94 = vcmp.eq.s32.totalorder %v92, %v46
    %vm95 = vcmp.eq.s32.totalorder %v92, %v47
    %vm96 = vcmp.eq.s32.totalorder %v92, %v48
    %vm97 = vcmp.eq.s32.totalorder %v92, %v49
    %vm98 = vcmp.eq.s32.totalorder %v92, %v50
    %v99 = vsel %vm93, 1, 0
    %v100 = vsel %vm94, 1, 0
    %v101 = vsel %vm95, 1, 0
    %v102 = vsel %vm96, 1, 0
    %v103 = vsel %vm97, 1, 0
    %v104 = vsel %vm98, 1, 0
    %v105 = vadd.s32 %v83, %v99
    %v106 = vadd.s32 %v84, %v100
    %v107 = vadd.s32 %v85, %v101
    %v108 = vadd.s32 %v86, %v102
    %v109 = vadd.s32 %v87, %v103
    %v110 = vadd.s32 %v88, %v104
    %v111 = vlaneseq
    %v112 = vshrl.u32 %v111, 7
    %v113 = vsub.s32 3, %v112
    %v114 = vrot.slane %v18, %v113
    %vm115 = vcmp.eq.s32.totalorder %v114, %v45
    %vm116 = vcmp.eq.s32.totalorder %v114, %v46
    %vm117 = vcmp.eq.s32.totalorder %v114, %v47
    %vm118 = vcmp.eq.s32.totalorder %v114, %v48
    %vm119 = vcmp.eq.s32.totalorder %v114, %v49
    %vm120 = vcmp.eq.s32.totalorder %v114, %v50
    %v121 = vsel %vm115, 1, 0
    %v122 = vsel %vm116, 1, 0
    %v123 = vsel %vm117, 1, 0
    %v124 = vsel %vm118, 1, 0
    %v125 = vsel %vm119, 1, 0
    %v126 = vsel %vm120, 1, 0
    %v127 = vadd.s32 %v105, %v121
    %v128 = vadd.s32 %v106, %v122
    %v129 = vadd.s32 %v107, %v123
    %v130 = vadd.s32 %v108, %v124
    %v131 = vadd.s32 %v109, %v125
    %v132 = vadd.s32 %v110, %v126
    %v133 = vlaneseq
    %v134 = vshrl.u32 %v133, 7
    %v135 = vsub.s32 4, %v134
    %v136 = vrot.slane %v18, %v135
    %vm137 = vcmp.eq.s32.totalorder %v136, %v45
    %vm138 = vcmp.eq.s32.totalorder %v136, %v46
    %vm139 = vcmp.eq.s32.totalorder %v136, %v47
    %vm140 = vcmp.eq.s32.totalorder %v136, %v48
    %vm141 = vcmp.eq.s32.totalorder %v136, %v49
    %vm142 = vcmp.eq.s32.totalorder %v136, %v50
    %v143 = vsel %vm137, 1, 0
    %v144 = vsel %vm138, 1, 0
    %v145 = vsel %vm139, 1, 0
    %v146 = vsel %vm140, 1, 0
    %v147 = vsel %vm141, 1, 0
    %v148 = vsel %vm142, 1, 0
    %v149 = vadd.s32 %v127, %v143
    %v150 = vadd.s32 %v128, %v144
    %v151 = vadd.s32 %v129, %v145
    %v152 = vadd.s32 %v130, %v146
    %v153 = vadd.s32 %v131, %v147
    %v154 = vadd.s32 %v132, %v148
    %v155 = vlaneseq
    %v156 = vshrl.u32 %v155, 7
    %v157 = vsub.s32 5, %v156
    %v158 = vrot.slane %v18, %v157
    %vm159 = vcmp.eq.s32.totalorder %v158, %v45
    %vm160 = vcmp.eq.s32.totalorder %v158, %v46
    %vm161 = vcmp.eq.s32.totalorder %v158, %v47
    %vm162 = vcmp.eq.s32.totalorder %v158, %v48
    %vm163 = vcmp.eq.s32.totalorder %v158, %v49
    %vm164 = vcmp.eq.s32.totalorder %v158, %v50
    %v165 = vsel %vm159, 1, 0
    %v166 = vsel %vm160, 1, 0
    %v167 = vsel %vm161, 1, 0
    %v168 = vsel %vm162, 1, 0
    %v169 = vsel %vm163, 1, 0
    %v170 = vsel %vm164, 1, 0
    %v171 = vadd.s32 %v149, %v165
    %v172 = vadd.s32 %v150, %v166
    %v173 = vadd.s32 %v151, %v167
    %v174 = vadd.s32 %v152, %v168
    %v175 = vadd.s32 %v153, %v169
    %v176 = vadd.s32 %v154, %v170
    %v177 = vlaneseq
    %v178 = vshrl.u32 %v177, 7
    %v179 = vsub.s32 6, %v178
    %v180 = vrot.slane %v18, %v179
    %vm181 = vcmp.eq.s32.totalorder %v180, %v45
    %vm182 = vcmp.eq.s32.totalorder %v180, %v46
    %vm183 = vcmp.eq.s32.totalorder %v180, %v47
    %vm184 = vcmp.eq.s32.totalorder %v180, %v48
    %vm185 = vcmp.eq.s32.totalorder %v180, %v49
    %vm186 = vcmp.eq.s32.totalorder %v180, %v50
    %v187 = vsel %vm181, 1, 0
    %v188 = vsel %vm182, 1, 0
    %v189 = vsel %vm183, 1, 0
    %v190 = vsel %vm184, 1, 0
    %v191 = vsel %vm185, 1, 0
    %v192 = vsel %vm186, 1, 0
    %v193 = vadd.s32 %v171, %v187
    %v194 = vadd.s32 %v172, %v188
    %v195 = vadd.s32 %v173, %v189
    %v196 = vadd.s32 %v174, %v190
    %v197 = vadd.s32 %v175, %v191
    %v198 = vadd.s32 %v176, %v192
    %v199 = vlaneseq
    %v200 = vshrl.u32 %v199, 7
    %v201 = vsub.s32 7, %v200
    %v202 = vrot.slane %v18, %v201
    %vm203 = vcmp.eq.s32.totalorder %v202, %v45
    %vm204 = vcmp.eq.s32.totalorder %v202, %v46
    %vm205 = vcmp.eq.s32.totalorder %v202, %v47
    %vm206 = vcmp.eq.s32.totalorder %v202, %v48
    %vm207 = vcmp.eq.s32.totalorder %v202, %v49
    %vm208 = vcmp.eq.s32.totalorder %v202, %v50
    %v209 = vsel %vm203, 1, 0
    %v210 = vsel %vm204, 1, 0
    %v211 = vsel %vm205, 1, 0
    %v212 = vsel %vm206, 1, 0
    %v213 = vsel %vm207, 1, 0
    %v214 = vsel %vm208, 1, 0
    %v215 = vadd.s32 %v193, %v209
    %v216 = vadd.s32 %v194, %v210
    %v217 = vadd.s32 %v195, %v211
    %v218 = vadd.s32 %v196, %v212
    %v219 = vadd.s32 %v197, %v213
    %v220 = vadd.s32 %v198, %v214
    %v221 = vlaneseq
    %v222 = vshrl.u32 %v221, 7
    %v223 = vsub.s32 0, %v222
    %v224 = vrot.slane %v19, %v223
    %vm225 = vcmp.eq.s32.totalorder %v224, %v45
    %vm226 = vcmp.eq.s32.totalorder %v224, %v46
    %vm227 = vcmp.eq.s32.totalorder %v224, %v47
    %vm228 = vcmp.eq.s32.totalorder %v224, %v48
    %vm229 = vcmp.eq.s32.totalorder %v224, %v49
    %vm230 = vcmp.eq.s32.totalorder %v224, %v50
    %v231 = vsel %vm225, 1, 0
    %v232 = vsel %vm226, 1, 0
    %v233 = vsel %vm227, 1, 0
    %v234 = vsel %vm228, 1, 0
    %v235 = vsel %vm229, 1, 0
    %v236 = vsel %vm230, 1, 0
    %v237 = vadd.s32 %v215, %v231
    %v238 = vadd.s32 %v216, %v232
    %v239 = vadd.s32 %v217, %v233
    %v240 = vadd.s32 %v218, %v234
    %v241 = vadd.s32 %v219, %v235
    %v242 = vadd.s32 %v220, %v236
    %v243 = vlaneseq
    %v244 = vshrl.u32 %v243, 7
    %v245 = vsub.s32 1, %v244
    %v246 = vrot.slane %v19, %v245
    %vm247 = vcmp.eq.s32.totalorder %v246, %v45
    %vm248 = vcmp.eq.s32.totalorder %v246, %v46
    %vm249 = vcmp.eq.s32.totalorder %v246, %v47
    %vm250 = vcmp.eq.s32.totalorder %v246, %v48
    %vm251 = vcmp.eq.s32.totalorder %v246, %v49
    %vm252 = vcmp.eq.s32.totalorder %v246, %v50
    %v253 = vsel %vm247, 1, 0
    %v254 = vsel %vm248, 1, 0
    %v255 = vsel %vm249, 1, 0
    %v256 = vsel %vm250, 1, 0
    %v257 = vsel %vm251, 1, 0
    %v258 = vsel %vm252, 1, 0
    %v259 = vadd.s32 %v237, %v253
    %v260 = vadd.s32 %v238, %v254
    %v261 = vadd.s32 %v239, %v255
    %v262 = vadd.s32 %v240, %v256
    %v263 = vadd.s32 %v241, %v257
    %v264 = vadd.s32 %v242, %v258
    %v265 = vcvt.s32.f32 %v259
    %v266 = vcvt.s32.f32 %v260
    %v267 = vcvt.s32.f32 %v261
    %v268 = vcvt.s32.f32 %v262
    %v269 = vcvt.s32.f32 %v263
    %v270 = vcvt.s32.f32 %v264
    %vm271 = vcmask 392192
    %v273 = vsel %vm271, %v20, 0
    %v276 = vsel %vm271, %v21, 0
    %v279 = vsel %vm271, %v22, 0
    %v282 = vsel %vm271, %v23, 0
    %v285 = vsel %vm271, %v24, 0
    %v288 = vsel %vm271, %v25, 0
    %v291 = vsel %vm271, %v26, 0
    %v294 = vsel %vm271, %v27, 0
    %296 = vmatprep.subr.mxu0 0.0
    %297 = vmatpush1.msra.mxu0 %v265
    %298 = vmatprep.subr.mxu0 0.0
    %299 = vmatpush1.msra.mxu0 %v266
    %300 = vmatprep.subr.mxu0 0.0
    %301 = vmatpush1.msra.mxu0 %v267
    %302 = vmatprep.subr.mxu0 0.0
    %303 = vmatpush1.msra.mxu0 %v268
    %304 = vmatprep.subr.mxu0 0.0
    %305 = vmatpush1.msra.mxu0 %v269
    %306 = vmatprep.subr.mxu0 0.0
    %307 = vmatpush1.msra.mxu0 %v270
    %308 = vmatprep.subr.mxu0 0.0
    %309 = vmatpush1.msra.mxu0 0.0
    %310 = vmatprep.subr.mxu0 0.0
    %311 = vmatpush1.msra.mxu0 0.0
    %312 = vmatprep.subr.mxu0 0.0
    %313 = vmatpush1.msra.mxu0 0.0
    %314 = vmatprep.subr.mxu0 0.0
    %315 = vmatpush1.msra.mxu0 0.0
    %316 = vmatprep.subr.mxu0 0.0
    %317 = vmatpush1.msra.mxu0 0.0
    %318 = vmatprep.subr.mxu0 0.0
    %319 = vmatpush1.msra.mxu0 0.0
    %320 = vmatprep.subr.mxu0 0.0
    %321 = vmatpush1.msra.mxu0 0.0
    %322 = vmatprep.subr.mxu0 0.0
    %323 = vmatpush1.msra.mxu0 0.0
    %324 = vmatprep.subr.mxu0 0.0
    %325 = vmatpush1.msra.mxu0 0.0
    %326 = vmatprep.subr.mxu0 0.0
    %327 = vmatpush1.msra.mxu0 0.0
    %328 = vmatprep.subr.mxu0 0.0
    %329 = vmatpush1.msra.mxu0 0.0
    %330 = vmatprep.subr.mxu0 0.0
    %331 = vmatpush1.msra.mxu0 0.0
    %332 = vmatprep.subr.mxu0 0.0
    %333 = vmatpush1.msra.mxu0 0.0
    %334 = vmatprep.subr.mxu0 0.0
    %335 = vmatpush1.msra.mxu0 0.0
    %336 = vmatprep.subr.mxu0 0.0
    %337 = vmatpush1.msra.mxu0 0.0
    %338 = vmatprep.subr.mxu0 0.0
    %339 = vmatpush1.msra.mxu0 0.0
    %340 = vmatprep.subr.mxu0 0.0
    %341 = vmatpush1.msra.mxu0 0.0
    %342 = vmatprep.subr.mxu0 0.0
    %343 = vmatpush1.msra.mxu0 0.0
    %344 = vmatprep.subr.mxu0 0.0
    %345 = vmatpush1.msra.mxu0 0.0
    %346 = vmatprep.subr.mxu0 0.0
    %347 = vmatpush1.msra.mxu0 0.0
    %348 = vmatprep.subr.mxu0 0.0
    %349 = vmatpush1.msra.mxu0 0.0
    %350 = vmatprep.subr.mxu0 0.0
    %351 = vmatpush1.msra.mxu0 0.0
    %352 = vmatprep.subr.mxu0 0.0
    %353 = vmatpush1.msra.mxu0 0.0
    %354 = vmatprep.subr.mxu0 0.0
    %355 = vmatpush1.msra.mxu0 0.0
    %356 = vmatprep.subr.mxu0 0.0
    %357 = vmatpush1.msra.mxu0 0.0
    %358 = vmatprep.subr.mxu0 0.0
    %359 = vmatpush1.msra.mxu0 0.0
    %360 = vmatprep.mubr.f32.mxu0 0.0
    %361 = vmatmul.mubr.f32.gmra.mrb[0].mxu0 %v273
    %v362 = vpop.f32.mrb[0].mxu0
    %v363 = vadd.f32 0.0, %v362
    %v364 = vpop.f32.mrb[0].mxu0
    %365 = vmatprep.mubr.f32.mxu0 0.0
    %366 = vmatmul.mubr.f32.gmra.mrb[0].mxu0 %v276
    %v367 = vpop.f32.mrb[0].mxu0
    %v368 = vadd.f32 0.0, %v367
    %v369 = vpop.f32.mrb[0].mxu0
    %370 = vmatprep.mubr.f32.mxu0 0.0
    %371 = vmatmul.mubr.f32.gmra.mrb[0].mxu0 %v279
    %v372 = vpop.f32.mrb[0].mxu0
    %v373 = vadd.f32 0.0, %v372
    %v374 = vpop.f32.mrb[0].mxu0
    %375 = vmatprep.mubr.f32.mxu0 0.0
    %376 = vmatmul.mubr.f32.gmra.mrb[0].mxu0 %v282
    %v377 = vpop.f32.mrb[0].mxu0
    %v378 = vadd.f32 0.0, %v377
    %v379 = vpop.f32.mrb[0].mxu0
    %380 = vmatprep.mubr.f32.mxu0 0.0
    %381 = vmatmul.mubr.f32.gmra.mrb[0].mxu0 %v285
    %v382 = vpop.f32.mrb[0].mxu0
    %v383 = vadd.f32 0.0, %v382
    %v384 = vpop.f32.mrb[0].mxu0
    %385 = vmatprep.mubr.f32.mxu0 0.0
    %386 = vmatmul.mubr.f32.gmra.mrb[0].mxu0 %v288
    %v387 = vpop.f32.mrb[0].mxu0
    %v388 = vadd.f32 0.0, %v387
    %v389 = vpop.f32.mrb[0].mxu0
    %390 = vmatprep.mubr.f32.mxu0 0.0
    %391 = vmatmul.mubr.f32.gmra.mrb[0].mxu0 %v291
    %v392 = vpop.f32.mrb[0].mxu0
    %v393 = vadd.f32 0.0, %v392
    %v394 = vpop.f32.mrb[0].mxu0
    %395 = vmatprep.mubr.f32.mxu0 0.0
    %396 = vmatmul.mubr.f32.gmra.mrb[0].mxu0 %v294
    %v397 = vpop.f32.mrb[0].mxu0
    %v398 = vadd.f32 0.0, %v397
    %v399 = vpop.f32.mrb[0].mxu0
    %400 = vdwg.mxu0
    %402 = vset.pattern.permute.xlu0 0
    %403 = vperm.xlu0 %402, %v28
    %v404 = vpop.permute.xlu0 %403
    %407 = vset.pattern.permute.xlu0 0
    %408 = vperm.xlu0 %407, %v29
    %v409 = vpop.permute.xlu0 %408
    %412 = vset.pattern.permute.xlu0 0
    %413 = vperm.xlu0 %412, %v30
    %v414 = vpop.permute.xlu0 %413
    %417 = vset.pattern.permute.xlu0 0
    %418 = vperm.xlu0 %417, %v31
    %v419 = vpop.permute.xlu0 %418
    %422 = vset.pattern.permute.xlu0 0
    %423 = vperm.xlu0 %422, %v32
    %v424 = vpop.permute.xlu0 %423
    %427 = vset.pattern.permute.xlu0 0
    %428 = vperm.xlu0 %427, %v33
    %v429 = vpop.permute.xlu0 %428
    %432 = vset.pattern.permute.xlu0 0
    %433 = vperm.xlu0 %432, %v34
    %v434 = vpop.permute.xlu0 %433
    %437 = vset.pattern.permute.xlu0 0
    %438 = vperm.xlu0 %437, %v35
    %v439 = vpop.permute.xlu0 %438
    %v441 = vmul.f32 %v363, %v404
    %v442 = vmul.f32 %v368, %v409
    %v443 = vmul.f32 %v373, %v414
    %v444 = vmul.f32 %v378, %v419
    %v445 = vmul.f32 %v383, %v424
    %v446 = vmul.f32 %v388, %v429
    %v447 = vmul.f32 %v393, %v434
    %v448 = vmul.f32 %v398, %v439
    %450 = vset.pattern.permute.xlu0 0
    %451 = vperm.xlu0 %450, %v36
    %v452 = vpop.permute.xlu0 %451
    %455 = vset.pattern.permute.xlu0 0
    %456 = vperm.xlu0 %455, %v37
    %v457 = vpop.permute.xlu0 %456
    %460 = vset.pattern.permute.xlu0 0
    %461 = vperm.xlu0 %460, %v38
    %v462 = vpop.permute.xlu0 %461
    %465 = vset.pattern.permute.xlu0 0
    %466 = vperm.xlu0 %465, %v39
    %v467 = vpop.permute.xlu0 %466
    %470 = vset.pattern.permute.xlu0 0
    %471 = vperm.xlu0 %470, %v40
    %v472 = vpop.permute.xlu0 %471
    %475 = vset.pattern.permute.xlu0 0
    %476 = vperm.xlu0 %475, %v41
    %v477 = vpop.permute.xlu0 %476
    %480 = vset.pattern.permute.xlu0 0
    %481 = vperm.xlu0 %480, %v42
    %v482 = vpop.permute.xlu0 %481
    %485 = vset.pattern.permute.xlu0 0
    %486 = vperm.xlu0 %485, %v43
    %v487 = vpop.permute.xlu0 %486
    %v489 = vadd.f32 %v441, %v452
    %v490 = vadd.f32 %v442, %v457
    %v491 = vadd.f32 %v443, %v462
    %v492 = vadd.f32 %v444, %v467
    %v493 = vadd.f32 %v445, %v472
    %v494 = vadd.f32 %v446, %v477
    %v495 = vadd.f32 %v447, %v482
    %v496 = vadd.f32 %v448, %v487
    %v497 = vmul.f32 %v489, %v493
    %v498 = vmul.f32 %v490, %v494
    %v499 = vmul.f32 %v491, %v495
    %v500 = vmul.f32 %v492, %v496
    %v501 = vadd.f32 %v497, %v498
    %v502 = vadd.f32 %v501, %v499
    %v503 = vadd.f32 %v502, %v500
    %v504 = vrot.slane %v503, 4
    %v505 = vadd.f32 %v503, %v504
    %v506 = vrot.slane %v505, 2
    %v507 = vadd.f32 %v505, %v506
    %v508 = vrot.slane %v507, 1
    %v509 = vadd.f32 %v507, %v508
    %v510 = vsub.f32 0.0, %v509
    %v511 = vmul.f32 %v510, 1.442695
    %v512 = vpow.pop %v511
    %v513 = vadd.f32 %v512, 1.0
    %v514 = vrcp.pop %v513
    %515 = vst [vmem:[#allocation2] sm:$0x1] %v514
    // Predicated region
    $region18: #{tpu_custom_call.1} parent=1 // pred_check
      _
    $region19: #{tpu_custom_call.1} parent=1 // pred_check_branch
      %517 = sbr.rel (0) target = $region21
    $region20: #{tpu_custom_call.1} parent=1 // pred_region
      %s519 = ssub.s32 16, 16
      %520 = vsyncadd [#allocation3], %s519
      %s522 = sshll.u32 [#allocation2], 4
      %s523 = int_to_ptr.vmem [resolvable:$true] %s522
      %525 = dma.vmem_to_hbm [thread:$0]  %s523, 16, %s4, [#allocation3]
    $region21: #{tpu_custom_call.1} parent=1 // pred_fallthru
      _
    // Predicated region
    $region22: #{tpu_custom_call.1} parent=1 // pred_check
      _
    $region23: #{tpu_custom_call.1} parent=1 // pred_check_branch
      %527 = sbr.rel (0) target = $region25
    $region24: #{tpu_custom_call.1} parent=1 // pred_region
      %528 = dma.done [#allocation3], 16
    $region25: #{tpu_custom_call.1} parent=1 // pred_fallthru
      _
    %529 = vsyncpa [#allocation3], 1

</llo_original>
